<compile_context>
chip_gen: v5e
topology: v5e:2x2
jax: 0.10.0
libtpu: 0.0.40
codegen_flags: <defaults>
</compile_context>

<pallas_src>
import functools

import jax
import jax.numpy as jnp
from jax import lax
from jax.experimental import pallas as pl
from jax.experimental.pallas import tpu as pltpu

LANES = 128
# f32: 2048 rows * 128 lanes * 4 B = 1 MiB per input block.
# 2 inputs x 2 pipeline buffers = 4 MiB -> fits v5e's 16 MiB scoped VMEM and
# is deep in the flat part of the tile-size vs. HBM-roofline curve on v6e/v7x.
MAX_BLOCK_ROWS = 2048


def _partial_sqdiff_kernel(yhat_ref, y_ref, out_ref, *,
                           block_rows, total_rows, needs_mask):
    # Cast inside the kernel so HBM traffic stays at the input dtype width.
    d = yhat_ref[...].astype(jnp.float32) - y_ref[...].astype(jnp.float32)
    dd = d * d

    if needs_mask:
        # Last grid step may read a partial (garbage-padded) block: zero it.
        row_ids = lax.broadcasted_iota(jnp.int32, (block_rows, LANES), 0)
        global_row = pl.program_id(0) * block_rows + row_ids
        dd = jnp.where(global_row < total_rows, dd, jnp.float32(0.0))

    # Lane-parallel partial reduction: (block_rows, 128) -> (8, 128).
    # Pure VPU adds across vregs; no per-step cross-lane XLU reduce and no
    # serial scalar dependency between grid steps.
    out_ref[...] = jnp.sum(dd.reshape(block_rows // 8, 8, LANES), axis=0)


def rmse_loss(yhat: jax.Array, y: jax.Array) -> jax.Array:
    """Pallas implementation of sqrt(nn.MSELoss()(yhat, y))."""
    assert yhat.shape == y.shape, "yhat and y must have identical shapes"
    n = yhat.size
    assert n > 0

    # dtype-aware sublane packing (f32 -> 8 rows, bf16 -> 16, int8/fp8 -> 32).
    itemsize = max(jnp.dtype(yhat.dtype).itemsize, jnp.dtype(y.dtype).itemsize)
    pack = max(1, 4 // max(1, itemsize))
    row_gran = 8 * pack
    elem_gran = row_gran * LANES

    yf = yhat.reshape(-1)
    xf = y.reshape(-1)

    # Only pad when the flat size is not already tile-aligned (common case:
    # no pad -> no extra HBM copies).  Zero padding of BOTH inputs contributes
    # zero squared diff; the mean still divides by the unpadded n.
    n_pad = (-n) % elem_gran
    if n_pad:
        # TODO(synk): a 1-D block layout with in-kernel lane masking would
        # avoid this copy for arbitrary n; kept simple since aligned sizes
        # (the common case) already skip it.
        yf = jnp.pad(yf, (0, n_pad))
        xf = jnp.pad(xf, (0, n_pad))

    rows = (n + n_pad) // LANES
    yf = yf.reshape(rows, LANES)
    xf = xf.reshape(rows, LANES)

    # Both rows and MAX_BLOCK_ROWS are multiples of row_gran, so min() is too.
    block_rows = min(MAX_BLOCK_ROWS, rows)
    num_blocks = pl.cdiv(rows, block_rows)
    needs_mask = (rows % block_rows) != 0

    kernel = functools.partial(
        _partial_sqdiff_kernel,
        block_rows=block_rows,
        total_rows=rows,
        needs_mask=needs_mask,
    )

    bytes_accessed = int(
        yf.size * yf.dtype.itemsize
        + xf.size * xf.dtype.itemsize
        + num_blocks * 8 * LANES * 4
    )

    partials = pl.pallas_call(
        kernel,
        out_shape=jax.ShapeDtypeStruct((num_blocks * 8, LANES), jnp.float32),
        grid_spec=pltpu.PrefetchScalarGridSpec(
            num_scalar_prefetch=0,
            grid=(num_blocks,),
            in_specs=[
                pl.BlockSpec((block_rows, LANES), lambda i: (i, 0)),
                pl.BlockSpec((block_rows, LANES), lambda i: (i, 0)),
            ],
            out_specs=pl.BlockSpec((8, LANES), lambda i: (i, 0)),
        ),
        compiler_params=pltpu.CompilerParams(
            # Each grid step writes its own output block -> fully parallel,
            # so both v7x TensorCores can be sharded across the grid.
            dimension_semantics=("parallel",),
        ),
        cost_estimate=pl.CostEstimate(
            flops=3 * n, transcendentals=0, bytes_accessed=bytes_accessed),
    )(yf, xf)

    # Tiny finishing reduction (num_blocks*8*128 values) + mean + sqrt in JAX.
    total = jnp.sum(partials, dtype=jnp.float32)
    return jnp.sqrt(total / jnp.float32(n)).astype(yhat.dtype)


if __name__ == "__main__":
    key = jax.random.PRNGKey(0)
    k1, k2, k3, k4, k5, k6 = jax.random.split(key, 6)

    # Primary small test consistent with a regression output (NCHW-like).
    shape = (2, 4, 16, 16)
    yhat = jax.random.normal(k1, shape, dtype=jnp.float32)
    y = jax.random.normal(k2, shape, dtype=jnp.float32)
    result = rmse_loss(yhat, y)
    jax.block_until_ready(result)
    ref = jnp.sqrt(jnp.mean((yhat - y) ** 2))
    assert jnp.allclose(result, ref, rtol=1e-5, atol=1e-6), (result, ref)

    # Exercise the partial-block masking path (rows not a multiple of block).
    shape2 = (2056, 128)
    yhat2 = jax.random.normal(k3, shape2, dtype=jnp.float32)
    y2 = jax.random.normal(k4, shape2, dtype=jnp.float32)
    result2 = rmse_loss(yhat2, y2)
    jax.block_until_ready(result2)
    ref2 = jnp.sqrt(jnp.mean((yhat2 - y2) ** 2))
    assert jnp.allclose(result2, ref2, rtol=1e-4, atol=1e-6), (result2, ref2)

    # Exercise the small / non-aligned (padding fallback) path.
    shape3 = (3, 5, 7)
    yhat3 = jax.random.normal(k5, shape3, dtype=jnp.float32)
    y3 = jax.random.normal(k6, shape3, dtype=jnp.float32)
    result3 = rmse_loss(yhat3, y3)
    jax.block_until_ready(result3)
    ref3 = jnp.sqrt(jnp.mean((yhat3 - y3) ** 2))
    assert jnp.allclose(result3, ref3, rtol=1e-4, atol=1e-6), (result3, ref3)

    print("KERNEL_OK")
</pallas_src>

<mosaic_0001>
module attributes {stable_mosaic.version = 11 : i64} {
  func.func @_partial_sqdiff_kernel(%arg0: i32, %arg1: memref<16x128xf32, #tpu.memory_space<vmem>>, %arg2: memref<16x128xf32, #tpu.memory_space<vmem>>, %arg3: memref<8x128xf32, #tpu.memory_space<vmem>>) attributes {dimension_semantics = [#tpu.dimension_semantics<parallel>], iteration_bounds = array<i64: 1>, scalar_prefetch = 0 : i64, scratch_operands = 0 : i64, tpu.core_type = #tpu.core_type<tc>, window_params = [{transform_indices = @transform_0, window_bounds = array<i64: 16, 128>}, {transform_indices = @transform_1, window_bounds = array<i64: 16, 128>}, {transform_indices = @transform_2, window_bounds = array<i64: 8, 128>}]} {
    %c0 = arith.constant 0 : index
    %c0_0 = arith.constant 0 : index
    %0 = vector.load %arg1[%c0, %c0_0] : memref<16x128xf32, #tpu.memory_space<vmem>>, vector<16x128xf32>
    %c0_1 = arith.constant 0 : index
    %c0_2 = arith.constant 0 : index
    %1 = vector.load %arg2[%c0_1, %c0_2] : memref<16x128xf32, #tpu.memory_space<vmem>>, vector<16x128xf32>
    %2 = arith.subf %0, %1 : vector<16x128xf32>
    %3 = arith.mulf %2, %2 : vector<16x128xf32>
    %4 = vector.shape_cast %3 : vector<16x128xf32> to vector<2x8x128xf32>
    %cst = arith.constant dense<0.000000e+00> : vector<8x128xf32>
    %5 = vector.multi_reduction <add>, %4, %cst [0] : vector<2x8x128xf32> to vector<8x128xf32>
    %c0_3 = arith.constant 0 : index
    %c0_4 = arith.constant 0 : index
    %6 = vector.load %arg3[%c0_3, %c0_4] : memref<8x128xf32, #tpu.memory_space<vmem>>, vector<8x128xf32>
    tpu.vector_store %arg3[%c0_3, %c0_4], %5 {strides = array<i32>} : memref<8x128xf32, #tpu.memory_space<vmem>>, vector<8x128xf32>,
    return
  }
  func.func @transform_0(%arg0: i32) -> (i32, i32) {
    %c0_i32 = arith.constant 0 : i32
    %c0_i32_0 = arith.constant 0 : i32
    return %arg0, %c0_i32 : i32, i32
  }
  func.func @transform_1(%arg0: i32) -> (i32, i32) {
    %c0_i32 = arith.constant 0 : i32
    %c0_i32_0 = arith.constant 0 : i32
    return %arg0, %c0_i32 : i32, i32
  }
  func.func @transform_2(%arg0: i32) -> (i32, i32) {
    %c0_i32 = arith.constant 0 : i32
    %c0_i32_0 = arith.constant 0 : i32
    return %arg0, %c0_i32 : i32, i32
  }
}

</mosaic_0001>

<llo_original>
// kernel: tpu_custom_call.1
$region0: #{tpu_custom_call.1}
  #allocation0 [shape = 'u32[]', space=smem, size = 0x4, offset = 0x4, fixed_abs, tag = 'smem constant byte address 0x4 - core index']
  #allocation1 [shape = 'u32[72,128]{1,0:T(1,128)}', space=vmem, size = 0x9000, scoped, tag = 'internal scratch']
  %s0 = inlined_call_operand.hbm [shape: f32[16,128], index: 0, kind: input, shape index: {}]
  %s1 = inlined_call_operand.hbm [shape: f32[16,128], index: 1, kind: input, shape index: {}]
  %s2 = inlined_call_operand.hbm [shape: f32[8,128], index: 2, kind: output, shape index: {}]
  %s3 = sld [smem:[#allocation0]]
  $region26: #{tpu_custom_call.1} parent=0
    _
  %s5 = ssub.s32 1, %s3
  %s6 = scalar_select 0, %s5, %s3
  $region1: #{tpu_custom_call.1} parent=0
    #allocation2 [shape = 'u8[8192]{0}', space=vmem, size = 0x2000, scoped, tag = 'input window, operand 0, single buffered']
    #allocation3 [shape = 's32[1]{0}', space=sflag, size = 0x4, scoped, tag = 'scoped memory for tpu_custom_call.1']
    #allocation4 [shape = 's32[1]{0}', space=sflag, size = 0x4, scoped, tag = 'scoped memory for tpu_custom_call.1']
    #allocation5 [shape = 'u8[8192]{0}', space=vmem, size = 0x2000, scoped, tag = 'input window, operand 1, single buffered']
    #allocation6 [shape = 's32[1]{0}', space=sflag, size = 0x4, scoped, tag = 'scoped memory for tpu_custom_call.1']
    #allocation7 [shape = 'u8[4096]{0}', space=vmem, size = 0x1000, scoped, tag = 'output window, operand 0, single buffered']
    %7 = vsyncpa [#allocation3], 0
    %8 = vsyncpa [#allocation6], 0
    %9 = vsyncpa [#allocation4], 0
    // Predicated region
    $region2: #{tpu_custom_call.1} parent=1 // pred_check
      _
    $region3: #{tpu_custom_call.1} parent=1 // pred_check_branch
      %11 = sbr.rel (0) target = $region5
    $region4: #{tpu_custom_call.1} parent=1 // pred_region
      %13 = vsyncadd [#allocation3], 0
      %s14 = sshll.u32 %s0, 4
      %s15 = int_to_ptr.hbm [resolvable:$true] %s14
      %s16 = sshll.u32 [#allocation2], 4
      %s17 = int_to_ptr.vmem [resolvable:$true] %s16
      %22 = dma.hbm_to_vmem [thread:$0]  %s15, 256, %s17, [#allocation3], 128, 128, 8
    $region5: #{tpu_custom_call.1} parent=1 // pred_fallthru
      _
    // Predicated region
    $region6: #{tpu_custom_call.1} parent=1 // pred_check
      _
    $region7: #{tpu_custom_call.1} parent=1 // pred_check_branch
      %24 = sbr.rel (0) target = $region9
    $region8: #{tpu_custom_call.1} parent=1 // pred_region
      %26 = vsyncadd [#allocation6], 0
      %s27 = sshll.u32 %s1, 4
      %s28 = int_to_ptr.hbm [resolvable:$true] %s27
      %s29 = sshll.u32 [#allocation5], 4
      %s30 = int_to_ptr.vmem [resolvable:$true] %s29
      %35 = dma.hbm_to_vmem [thread:$0]  %s28, 256, %s30, [#allocation6], 128, 128, 8
    $region9: #{tpu_custom_call.1} parent=1 // pred_fallthru
      _
    // Predicated region
    $region10: #{tpu_custom_call.1} parent=1 // pred_check
      _
    $region11: #{tpu_custom_call.1} parent=1 // pred_check_branch
      %37 = sbr.rel (0) target = $region13
    $region12: #{tpu_custom_call.1} parent=1 // pred_region
      %39 = dma.done [#allocation3], 256
    $region13: #{tpu_custom_call.1} parent=1 // pred_fallthru
      _
    // Predicated region
    $region14: #{tpu_custom_call.1} parent=1 // pred_check
      _
    $region15: #{tpu_custom_call.1} parent=1 // pred_check_branch
      %41 = sbr.rel (0) target = $region17
    $region16: #{tpu_custom_call.1} parent=1 // pred_region
      %43 = dma.done [#allocation6], 256
    $region17: #{tpu_custom_call.1} parent=1 // pred_fallthru
      _
    %v44 = vld [vmem:[#allocation2] sm:$0xff]
    %v45 = vld [vmem:[#allocation2 + $0x8] sm:$0xff]
    %v46 = vld [vmem:[#allocation5] sm:$0xff]
    %v47 = vld [vmem:[#allocation5 + $0x8] sm:$0xff]
    %v48 = vsub.f32 %v44, %v46
    %v49 = vsub.f32 %v45, %v47
    %v50 = vmul.f32 %v48, %v48
    %v51 = vmul.f32 %v49, %v49
    %v52 = vadd.f32 %v50, %v51
    %53 = vst [vmem:[#allocation7] sm:$0xff] %v52
    // Predicated region
    $region18: #{tpu_custom_call.1} parent=1 // pred_check
      _
    $region19: #{tpu_custom_call.1} parent=1 // pred_check_branch
      %55 = sbr.rel (0) target = $region21
    $region20: #{tpu_custom_call.1} parent=1 // pred_region
      %57 = vsyncadd [#allocation4], 0
      %s59 = sshll.u32 [#allocation7], 4
      %s60 = int_to_ptr.vmem [resolvable:$true] %s59
      %s61 = sshll.u32 %s2, 4
      %s62 = int_to_ptr.hbm [resolvable:$true] %s61
      %64 = dma.vmem_to_hbm [thread:$0]  %s60, 128, %s62, [#allocation4]
    $region21: #{tpu_custom_call.1} parent=1 // pred_fallthru
      _
    // Predicated region
    $region22: #{tpu_custom_call.1} parent=1 // pred_check
      _
    $region23: #{tpu_custom_call.1} parent=1 // pred_check_branch
      %66 = sbr.rel (0) target = $region25
    $region24: #{tpu_custom_call.1} parent=1 // pred_region
      %68 = dma.done [#allocation4], 128
    $region25: #{tpu_custom_call.1} parent=1 // pred_fallthru
      _
    %69 = vsyncpa [#allocation3], 1
    %70 = vsyncpa [#allocation6], 1
    %71 = vsyncpa [#allocation4], 1

</llo_original>
